<compile_context>
chip_gen: v6e
topology: v6e:2x2x1
jax: 0.10.0
libtpu: 0.0.40
codegen_flags: <defaults>
</compile_context>

<pallas_src>
import functools

import jax
import jax.numpy as jnp
from jax.experimental import pallas as pl
from jax.experimental.pallas import tpu as pltpu

_LANE = 128


def _round_up(n, m):
    return ((n + m - 1) // m) * m


def _vmem_capacity_bytes():
    try:
        return int(pltpu.get_tpu_info().vmem_capacity_bytes)
    except Exception:
        return 64 * 1024 * 1024  # conservative fallback (v7x per-core VMEM)


def _largest_block_divisor(n_blocks, max_blocks):
    """Largest divisor of n_blocks that is <= max_blocks (>= 1)."""
    best = 1
    d = 1
    while d <= n_blocks and d <= max_blocks:
        if n_blocks % d == 0:
            best = d
        d += 1
    return best


def _choose_n_tile(n, k, e, in_bytes, out_bytes, batch):
    """Pick (TN, Np): lane-dense tile along N and the padded N extent."""
    cap_bytes = _vmem_capacity_bytes()
    budget = (cap_bytes * 5) // 8          # ~40 MiB on v7x, ~80 MiB on v5e/v6e
    per_col = 2 * k * in_bytes + 2 * e * out_bytes   # dbl-buffered P + O columns
    fixed = 2 * e * k * in_bytes                     # weight (worst case 2 bufs)
    # TODO(synk): single-buffer the weight block (constant index_map) via
    # pipeline_mode=pl.Buffered(1) to reclaim k*e*in_bytes of VMEM once that
    # path is exercised on this JAX version; weight is small so gain is modest.
    cap_cols = max(_LANE, (budget - fixed) // max(per_col, 1))
    cap_cols = min(cap_cols, 4096)         # amortize ~0.35us/step fixed overhead
    max_blocks = max(1, cap_cols // _LANE)

    if n <= _LANE:
        # Tiny spatial extent: one full-extent tile, no padding, no slice.
        return n, n

    np_ = _round_up(n, _LANE)
    n_blocks = np_ // _LANE
    nb = _largest_block_divisor(n_blocks, max_blocks)
    # v7x megacore: keep >= 2 grid steps when there is enough work.
    if batch * (n_blocks // nb) < 2 and n_blocks >= 2:
        nb = _largest_block_divisor(n_blocks, max(1, n_blocks // 2))
    return nb * _LANE, np_


def _patch_embed_kernel(w_ref, p_ref, o_ref):
    # w_ref: (E, K), p_ref: (K, TN), o_ref: (E, TN).  f32 MXU accumulation.
    o_ref[...] = jnp.dot(
        w_ref[...], p_ref[...], preferred_element_type=jnp.float32
    ).astype(o_ref.dtype)


def patch_embed_forward(x, weight, patch_size, patch_stride, *,
                        compute_dtype=jnp.bfloat16, out_dtype=None):
    """PatchEmbed forward (norm_layer=None -> nn.Identity).

    x:      [B, Cin, H, W]   (NCHW, matches PyTorch)
    weight: [E, Cin, kh, kw] (OIHW, matches nn.Conv2d.weight)
    compute_dtype: MXU operand dtype.  Defaults to bf16 (MXU-native on
                   v5e/v6e/v7x, halves HBM read traffic of the dominant
                   patch stream).  Pass jnp.float32 for strict parity with
                   the PyTorch f32 module.  Accumulation is always f32.
    out_dtype:     output dtype (defaults to x.dtype).
    returns [B, E, Ho, Wo]   (NCHW)
    """
    B, Cin, H, W = x.shape
    E = weight.shape[0]
    kh, kw = patch_size
    sh, sw = patch_stride
    Ho = (H - kh) // sh + 1
    Wo = (W - kw) // sw + 1
    K = Cin * kh * kw
    N = Ho * Wo

    cdt = jnp.dtype(compute_dtype) if compute_dtype is not None else jnp.dtype(x.dtype)
    odt = jnp.dtype(out_dtype) if out_dtype is not None else jnp.dtype(x.dtype)

    # ---- patch matrix P[B, K, N]: K = (c, i, j), N = (ho, wo) --------------
    # Cast first so the convert fuses into the single reshape/transpose copy.
    if (sh, sw) == (kh, kw):
        # Non-overlapping patches (the PGNet case): pure layout shuffle,
        # no im2col materialization.
        xc = x[:, :, : Ho * kh, : Wo * kw].astype(cdt)
        p = xc.reshape(B, Cin, Ho, kh, Wo, kw)
        p = p.transpose(0, 1, 3, 5, 2, 4).reshape(B, K, N)
    else:
        # Overlapping strides: im2col fallback (channel-major features,
        # matching weight.reshape(E, K) ordering).
        patches = jax.lax.conv_general_dilated_patches(
            x.astype(cdt),
            filter_shape=(kh, kw),
            window_strides=(sh, sw),
            padding="VALID",
            dimension_numbers=("NCHW", "OIHW", "NCHW"),
        )  # [B, Cin*kh*kw, Ho, Wo]
        p = patches.reshape(B, K, N)

    w = weight.reshape(E, K).astype(cdt)

    in_bytes = cdt.itemsize
    out_bytes = odt.itemsize
    TN, Np = _choose_n_tile(N, K, E, in_bytes, out_bytes, B)
    if Np != N:
        # Zero columns are benign: they produce zero output columns sliced off
        # below.  No-op whenever Ho*Wo is a multiple of 128 (realistic shapes).
        p = jnp.pad(p, ((0, 0), (0, 0), (0, Np - N)))

    vmem_need = (2 * K * TN * in_bytes + 2 * E * TN * out_bytes
                 + 2 * E * K * in_bytes)
    cap = _vmem_capacity_bytes()
    vmem_limit = int(min(max(2 * vmem_need, 32 * 1024 * 1024), (cap * 3) // 4))

    grid = (B, Np // TN)
    out = pl.pallas_call(
        _patch_embed_kernel,
        out_shape=jax.ShapeDtypeStruct((B, E, Np), odt),
        grid=grid,
        in_specs=[
            # Weight: constant index_map -> its VMEM copy is reused across all
            # grid steps (no re-DMA per step).
            pl.BlockSpec((E, K), lambda b, n: (0, 0)),
            pl.BlockSpec((None, K, TN), lambda b, n: (b, 0, n)),
        ],
        out_specs=pl.BlockSpec((None, E, TN), lambda b, n: (b, 0, n)),
        compiler_params=pltpu.CompilerParams(
            # Both axes independent -> tiles shard across v7x's 2 TensorCores.
            dimension_semantics=("parallel", "parallel"),
            vmem_limit_bytes=vmem_limit,
        ),
        cost_estimate=pl.CostEstimate(
            flops=2 * B * N * K * E,
            transcendentals=0,
            bytes_accessed=(B * K * Np * in_bytes + E * K * in_bytes
                            + B * E * Np * out_bytes),
        ),
    )(w, p)

    if Np != N:
        out = out[:, :, :N]
    # Contiguous reshape -> free; no NHWC->NCHW transpose pass over the output.
    y = out.reshape(B, E, Ho, Wo)

    # norm_layer=None in this instantiation -> nn.Identity().
    # TODO(synk): if a concrete norm_layer (BatchNorm2d / LayerNorm) is used,
    # fuse its scale/shift into the kernel epilogue instead of a separate op.
    return y


if __name__ == "__main__":
    key = jax.random.PRNGKey(0)
    kx, kw_ = jax.random.split(key)

    # Small shapes consistent with the module: B=2, in_chans=4, H=W=16,
    # patch_size=stride=4, embed_dim=32.
    B, Cin, H, W = 2, 4, 16, 16
    E = 32
    patch_size = (4, 4)
    patch_stride = (4, 4)

    x = jax.random.normal(kx, (B, Cin, H, W), dtype=jnp.float32)
    weight = (
        jax.random.normal(
            kw_, (E, Cin, patch_size[0], patch_size[1]), dtype=jnp.float32
        )
        * 0.05
    )

    # Reference: plain-JAX conv with the module's exact semantics
    # (nn.Conv2d, bias=False, padding=0, norm=Identity).
    y_ref = jax.lax.conv_general_dilated(
        x, weight,
        window_strides=patch_stride,
        padding="VALID",
        dimension_numbers=("NCHW", "OIHW", "NCHW"),
    )

    # Strict-parity f32 path (matches the PyTorch module's default numerics).
    fwd_f32 = jax.jit(functools.partial(
        patch_embed_forward, patch_size=patch_size, patch_stride=patch_stride,
        compute_dtype=jnp.float32))
    y_f32 = jax.block_until_ready(fwd_f32(x, weight))
    assert y_f32.shape == y_ref.shape == (B, E, 4, 4), y_f32.shape
    assert jnp.allclose(y_f32, y_ref, atol=1e-4, rtol=1e-4), "f32 mismatch vs reference"

    # Default (perf-recommended) path: bf16 operands, f32 accumulation.
    fwd = jax.jit(functools.partial(
        patch_embed_forward, patch_size=patch_size, patch_stride=patch_stride))
    y = jax.block_until_ready(fwd(x, weight))
    assert y.shape == y_ref.shape
    assert jnp.allclose(y, y_ref, atol=1e-1, rtol=1e-1), "bf16 mismatch vs reference"

    print("KERNEL_OK")
</pallas_src>

<mosaic_0001>
module attributes {stable_mosaic.version = 11 : i64} {
  func.func @_patch_embed_kernel(%arg0: i32, %arg1: i32, %arg2: memref<32x64xf32, #tpu.memory_space<vmem>>, %arg3: memref<1x64x16xf32, #tpu.memory_space<vmem>>, %arg4: memref<1x32x16xf32, #tpu.memory_space<vmem>>) attributes {dimension_semantics = [#tpu.dimension_semantics<parallel>, #tpu.dimension_semantics<parallel>], iteration_bounds = array<i64: 2, 1>, scalar_prefetch = 0 : i64, scratch_operands = 0 : i64, tpu.core_type = #tpu.core_type<tc>, window_params = [{pipeline_mode = #tpu.pipeline_mode<synchronous>, transform_indices = @transform_0, window_bounds = array<i64: 32, 64>}, {transform_indices = @transform_1, window_bounds = array<i64: 1, 64, 16>}, {transform_indices = @transform_2, window_bounds = array<i64: 1, 32, 16>}]} {
    %c0 = arith.constant 0 : index
    %c0_0 = arith.constant 0 : index
    %0 = vector.load %arg2[%c0, %c0_0] : memref<32x64xf32, #tpu.memory_space<vmem>>, vector<32x64xf32>
    %c0_1 = arith.constant 0 : index
    %c0_2 = arith.constant 0 : index
    %c0_3 = arith.constant 0 : index
    %1 = vector.load %arg3[%c0_1, %c0_2, %c0_3] : memref<1x64x16xf32, #tpu.memory_space<vmem>>, vector<1x64x16xf32>
    %2 = vector.shape_cast %1 : vector<1x64x16xf32> to vector<64x16xf32>
    %cst = arith.constant dense<0.000000e+00> : vector<32x16xf32>
    %3 = tpu.matmul %0, %2, %cst {dimension_numbers = #tpu.dot_dimension_numbers<[1], [0], [0], [1], [0, 0, 1, 1], [], []>} : vector<32x64xf32>, vector<64x16xf32>, vector<32x16xf32> -> vector<32x16xf32>
    %c0_4 = arith.constant 0 : index
    %c0_5 = arith.constant 0 : index
    %c0_6 = arith.constant 0 : index
    %4 = vector.load %arg4[%c0_4, %c0_5, %c0_6] : memref<1x32x16xf32, #tpu.memory_space<vmem>>, vector<1x32x16xf32>
    %5 = vector.shape_cast %4 : vector<1x32x16xf32> to vector<32x16xf32>
    %6 = vector.shape_cast %3 : vector<32x16xf32> to vector<1x32x16xf32>
    tpu.vector_store %arg4[%c0_4, %c0_5, %c0_6], %6 {strides = array<i32>} : memref<1x32x16xf32, #tpu.memory_space<vmem>>, vector<1x32x16xf32>,
    return
  }
  func.func @transform_0(%arg0: i32, %arg1: i32) -> (i32, i32) {
    %c0_i32 = arith.constant 0 : i32
    %c0_i32_0 = arith.constant 0 : i32
    %c0_i32_1 = arith.constant 0 : i32
    return %c0_i32, %c0_i32_0 : i32, i32
  }
  func.func @transform_1(%arg0: i32, %arg1: i32) -> (i32, i32, i32) {
    %c0_i32 = arith.constant 0 : i32
    %c0_i32_0 = arith.constant 0 : i32
    return %arg0, %c0_i32, %arg1 : i32, i32, i32
  }
  func.func @transform_2(%arg0: i32, %arg1: i32) -> (i32, i32, i32) {
    %c0_i32 = arith.constant 0 : i32
    %c0_i32_0 = arith.constant 0 : i32
    return %arg0, %c0_i32, %arg1 : i32, i32, i32
  }
}

</mosaic_0001>

<llo_original>
// kernel: patch_embed_forward.1
$region0: #{patch_embed_forward.1}
  #allocation0 [shape = 'u32[]', space=smem, size = 0x4, offset = 0x4, fixed_abs, tag = 'smem constant byte address 0x4 - core index']
  #allocation1 [shape = 'u32[144,128]{1,0:T(1,128)}', space=vmem, size = 0x12000, scoped, tag = 'internal scratch']
  %s0 = inlined_call_operand.vmem [shape: f32[32,64], index: 0, kind: input, shape index: {}]
  %s1 = inlined_call_operand.vmem [shape: f32[2,64,16], index: 1, kind: input, shape index: {}]
  %s2 = inlined_call_operand.vmem [shape: f32[2,32,16], index: 2, kind: output, shape index: {}]
  %s3 = sld [smem:[#allocation0]]
  $region41: #{patch_embed_forward.1} parent=0
    _
  %s5 = ssub.s32 1, %s3
  %s6 = scalar_select 0, %s5, %s3
  loop: start=0, step=1, limit=4
  $region2: #{patch_embed_forward.1} parent=0 // loop_pre_header
    _
  $region3: #{patch_embed_forward.1} parent=0 // loop_header
    %s8 = sphi 0, %s12
    %p9 = scmp.ge.s32.totalorder %s8, 4
    %s15 = sphi 0, %s27
    %s16 = sphi 0, %s23
    %s17 = sphi 0, %s15
    %s18 = sphi 0, %s16
    %s19 = sphi 0, %s17
    %s20 = sphi 0, %s18
    %s28 = sphi 0, %s28
    %s30 = sphi 0, %s28
    %s31 = sphi 0, %s30
    %s45 = sphi 0, %s31
    %s53 = sphi 0, %s55
    %s56 = sphi 0, %s53
    %s57 = sphi 0, %s56
    %s73 = sphi 0, %s57
    %s81 = sphi 0, %s83
    %s84 = sphi 0, %s81
    %s85 = sphi 0, %s84
    %s101 = sphi 0, %s85
  $region4: #{patch_embed_forward.1} parent=0 // loop_header_branch
    %11 = sbr.rel (%p9) target = $region8
  $region5: #{patch_embed_forward.1} parent=0 // loop_body
    %s13 = ssub.s32 %s8, 1
    %s14 = ssub.s32 %s8, 2
    %s21 = sadd.s32 1, %s16
    %p22 = scmp.ge.s32.totalorder %s21, 1
    %s23 = scalar_select %p22, 0, %s21
    %s24 = sadd.s32 1, %s15
    %s25 = scalar_select %p22, %s24, %s15
    %p26 = scmp.ge.s32.totalorder %s25, 2
    %s27 = scalar_select %p26, 0, %s25
    %s29 = sadd.s32 %s28, 1
    %p32 = scmp.eq.s32.totalorder %s8, 1
    %p33 = scmp.ne.s32.totalorder %s28, %s30
    %p34 = scmp.eq.s32.totalorder %s8, 0
    %p35 = por %p33, %p34
    %p36 = scmp.ne.s32.totalorder %s28, %s30
    %p37 = scmp.eq.s32.totalorder %s13, 1
    %p38 = por %p36, %p37
    %p39 = scmp.ne.s32.totalorder %s30, %s31
    %p40 = scmp.eq.s32.totalorder %s13, 0
    %p41 = por %p39, %p40
    %p42 = scmp.ne.s32.totalorder %s30, %s31
    %p43 = scmp.eq.s32.totalorder %s14, 1
    %p44 = por %p42, %p43
    %p46 = scmp.ne.s32.totalorder %s31, %s45
    %p47 = scmp.eq.s32.totalorder %s14, 0
    %p48 = por %p46, %p47
    %s49 = ssub.s32 %s15, %s27
    %s50 = ssub.s32 %s16, %s23
    %s51 = sor.u32 %s49, %s50
    %p52 = scmp.eq.s32.totalorder %s51, 0
    %s54 = sadd.s32 %s53, 1
    %s55 = scalar_select %p52, %s53, %s54
    %p58 = pneg %p52
    %p59 = scmp.eq.s32.totalorder %s8, 1
    %p60 = por %p58, %p59
    %p61 = scmp.ne.s32.totalorder %s53, %s56
    %p62 = scmp.eq.s32.totalorder %s8, 0
    %p63 = por %p61, %p62
    %p64 = scmp.ne.s32.totalorder %s53, %s56
    %p65 = scmp.eq.s32.totalorder %s13, 1
    %p66 = por %p64, %p65
    %p67 = scmp.ne.s32.totalorder %s56, %s57
    %p68 = scmp.eq.s32.totalorder %s13, 0
    %p69 = por %p67, %p68
    %p70 = scmp.ne.s32.totalorder %s56, %s57
    %p71 = scmp.eq.s32.totalorder %s14, 1
    %p72 = por %p70, %p71
    %p74 = scmp.ne.s32.totalorder %s57, %s73
    %p75 = scmp.eq.s32.totalorder %s14, 0
    %p76 = por %p74, %p75
    %s77 = ssub.s32 %s15, %s27
    %s78 = ssub.s32 %s16, %s23
    %s79 = sor.u32 %s77, %s78
    %p80 = scmp.eq.s32.totalorder %s79, 0
    %s82 = sadd.s32 %s81, 1
    %s83 = scalar_select %p80, %s81, %s82
    %p86 = pneg %p80
    %p87 = scmp.eq.s32.totalorder %s8, 1
    %p88 = por %p86, %p87
    %p89 = scmp.ne.s32.totalorder %s81, %s84
    %p90 = scmp.eq.s32.totalorder %s8, 0
    %p91 = por %p89, %p90
    %p92 = scmp.ne.s32.totalorder %s81, %s84
    %p93 = scmp.eq.s32.totalorder %s13, 1
    %p94 = por %p92, %p93
    %p95 = scmp.ne.s32.totalorder %s84, %s85
    %p96 = scmp.eq.s32.totalorder %s13, 0
    %p97 = por %p95, %p96
    %p98 = scmp.ne.s32.totalorder %s84, %s85
    %p99 = scmp.eq.s32.totalorder %s14, 1
    %p100 = por %p98, %p99
    %p102 = scmp.ne.s32.totalorder %s85, %s101
    %p103 = scmp.eq.s32.totalorder %s14, 0
    %p104 = por %p102, %p103
    %p105 = scmp.le.s32.totalorder 1, %s8
    %p106 = scmp.lt.s32.totalorder %s8, 3
    %p107 = pnand %p105, %p106
    %p108 = pneg %p107
    // Predicated region
    $region9: #{patch_embed_forward.1} parent=5 // pred_check
      _
    $region10: #{patch_embed_forward.1} parent=5 // pred_check_branch
      %110 = sbr.rel (%p107) target = $region12
    $region11: #{patch_embed_forward.1} parent=5 // pred_region
      %s111 = ssub.s32 %s8, 1
      // Predicated region
      $region13: #{patch_embed_forward.1} parent=11 // pred_check
        %p112 = pneg %p41
      $region14: #{patch_embed_forward.1} parent=11 // pred_check_branch
        %114 = sbr.rel (%p112) target = $region16
      $region15: #{patch_embed_forward.1} parent=11 // pred_region
        _
      $region16: #{patch_embed_forward.1} parent=11 // pred_fallthru
        _
    $region12: #{patch_embed_forward.1} parent=5 // pred_fallthru
      _
    %p115 = scmp.lt.s32.totalorder %s8, 2
    // Predicated region
    $region17: #{patch_embed_forward.1} parent=5 // pred_check
      %p116 = pneg %p115
    $region18: #{patch_embed_forward.1} parent=5 // pred_check_branch
      %118 = sbr.rel (%p116) target = $region20
    $region19: #{patch_embed_forward.1} parent=5 // pred_region
      // Predicated region
      $region21: #{patch_embed_forward.1} parent=19 // pred_check
        %p119 = pneg %p63
      $region22: #{patch_embed_forward.1} parent=19 // pred_check_branch
        %121 = sbr.rel (%p119) target = $region24
      $region23: #{patch_embed_forward.1} parent=19 // pred_region
        %p122 = scmp.lt.s32.totalorder %s15, 1
        %s123 = scalar_select %p122, %s15, 1
        %p124 = scmp.lt.s32.totalorder %s16, 0
        %s125 = scalar_select %p124, %s16, 0
        %s126 = smul.addr %s123, 8
        %s127 = sadd.s32 %s125, %s126
        %s128 = smul.addr %s127, 8
        %s129 = scalar_lea.vmem %s1, %s128
      $region24: #{patch_embed_forward.1} parent=19 // pred_fallthru
        _
    $region20: #{patch_embed_forward.1} parent=5 // pred_fallthru
      _
    %p130 = scmp.le.s32.totalorder 1, %s8
    %p131 = scmp.lt.s32.totalorder %s8, 3
    %p132 = pnand %p130, %p131
    %p133 = pneg %p132
    // Predicated region
    $region25: #{patch_embed_forward.1} parent=5 // pred_check
      _
    $region26: #{patch_embed_forward.1} parent=5 // pred_check_branch
      %135 = sbr.rel (%p132) target = $region28
    $region27: #{patch_embed_forward.1} parent=5 // pred_region
      %s136 = ssub.s32 %s8, 1
      %p137 = pneg %p41
      %p138 = pneg %p38
      %p139 = scmp.lt.s32.totalorder %s17, 1
      %s140 = scalar_select %p139, %s17, 1
      %p141 = scmp.lt.s32.totalorder %s18, 0
      %s142 = scalar_select %p141, %s18, 0
      %s143 = smul.addr %s140, 8
      %s144 = sadd.s32 %s142, %s143
      %s145 = smul.addr %s144, 8
      %s146 = scalar_lea.vmem %s1, %s145
      %p147 = pneg %p69
      %p148 = pneg %p66
      %p149 = pneg %p97
      %p150 = pneg %p94
      %p151 = scmp.lt.s32.totalorder %s17, 1
      %s152 = scalar_select %p151, %s17, 1
      %p153 = scmp.lt.s32.totalorder %s18, 0
      %s154 = scalar_select %p153, %s18, 0
      %s155 = smul.addr %s152, 4
      %s156 = sadd.s32 %s154, %s155
      %s157 = smul.addr %s156, 8
      %s158 = scalar_lea.vmem %s2, %s157
      %p159 = scmp.lt.s32.totalorder %s17, 1
      %s160 = scalar_select %p159, %s17, 1
      %p161 = scmp.lt.s32.totalorder %s18, 0
      %s162 = scalar_select %p161, %s18, 0
      %s163 = smul.addr %s160, 8
      %s164 = sadd.s32 %s162, %s163
      %s165 = smul.addr %s164, 8
      %s166 = scalar_lea.vmem %s1, %s165
      %p167 = scmp.lt.s32.totalorder %s17, 1
      %s168 = scalar_select %p167, %s17, 1
      %p169 = scmp.lt.s32.totalorder %s18, 0
      %s170 = scalar_select %p169, %s18, 0
      %s171 = smul.addr %s168, 4
      %s172 = sadd.s32 %s170, %s171
      %s173 = smul.addr %s172, 8
      %s174 = scalar_lea.vmem %s2, %s173
      %v175 = vld [vmem:[%s0] sm:$0xff]
      %v176 = vld [vmem:[%s0 + $0x8] sm:$0xff]
      %v177 = vld [vmem:[%s0 + $0x10] sm:$0xff]
      %v178 = vld [vmem:[%s0 + $0x18] sm:$0xff]
      %v179 = vld [vmem:[%s166] sm:$0xff]
      %v180 = vld [vmem:[%s166 + $0x8] sm:$0xff]
      %v181 = vld [vmem:[%s166 + $0x10] sm:$0xff]
      %v182 = vld [vmem:[%s166 + $0x18] sm:$0xff]
      %v183 = vld [vmem:[%s166 + $0x20] sm:$0xff]
      %v184 = vld [vmem:[%s166 + $0x28] sm:$0xff]
      %v185 = vld [vmem:[%s166 + $0x30] sm:$0xff]
      %v186 = vld [vmem:[%s166 + $0x38] sm:$0xff]
      %vm187 = vcmask 523264
      %v189 = vsel %vm187, %v175, 0
      %v192 = vsel %vm187, %v176, 0
      %v195 = vsel %vm187, %v177, 0
      %v198 = vsel %vm187, %v178, 0
      %200 = vmatprep.subr.mxu0 0.0
      %201 = vmatpush1.msra.mxu0 0.0
      %202 = vmatprep.subr.mxu0 0.0
      %203 = vmatpush1.msra.mxu0 0.0
      %204 = vmatprep.subr.mxu0 0.0
      %205 = vmatpush1.msra.mxu0 0.0
      %206 = vmatprep.subr.mxu0 0.0
      %207 = vmatpush1.msra.mxu0 0.0
      %208 = vmatprep.subr.mxu0 0.0
      %209 = vmatpush1.msra.mxu0 0.0
      %210 = vmatprep.subr.mxu0 0.0
      %211 = vmatpush1.msra.mxu0 0.0
      %212 = vmatprep.subr.mxu0 0.0
      %213 = vmatpush1.msra.mxu0 0.0
      %214 = vmatprep.subr.mxu0 0.0
      %215 = vmatpush1.msra.mxu0 0.0
      %216 = vmatprep.subr.mxu0 0.0
      %217 = vmatpush1.msra.mxu0 %v186
      %218 = vmatprep.subr.mxu0 0.0
      %219 = vmatpush1.msra.mxu0 %v185
      %220 = vmatprep.subr.mxu0 0.0
      %221 = vmatpush1.msra.mxu0 %v184
      %222 = vmatprep.subr.mxu0 0.0
      %223 = vmatpush1.msra.mxu0 %v183
      %224 = vmatprep.subr.mxu0 0.0
      %225 = vmatpush1.msra.mxu0 %v182
      %226 = vmatprep.subr.mxu0 0.0
      %227 = vmatpush1.msra.mxu0 %v181
      %228 = vmatprep.subr.mxu0 0.0
      %229 = vmatpush1.msra.mxu0 %v180
      %230 = vmatprep.subr.mxu0 0.0
      %231 = vmatpush1.msra.mxu0 %v179
      %232 = vmatprep.subr.mxu0 0.0
      %233 = vmatpush2.msra.mxu0 0.0
      %234 = vmatprep.subr.mxu0 0.0
      %235 = vmatpush2.msra.mxu0 0.0
      %236 = vmatprep.subr.mxu0 0.0
      %237 = vmatpush2.msra.mxu0 0.0
      %238 = vmatprep.subr.mxu0 0.0
      %239 = vmatpush2.msra.mxu0 0.0
      %240 = vmatprep.subr.mxu0 0.0
      %241 = vmatpush2.msra.mxu0 0.0
      %242 = vmatprep.subr.mxu0 0.0
      %243 = vmatpush2.msra.mxu0 0.0
      %244 = vmatprep.subr.mxu0 0.0
      %245 = vmatpush2.msra.mxu0 0.0
      %246 = vmatprep.subr.mxu0 0.0
      %247 = vmatpush2.msra.mxu0 0.0
      %248 = vmatprep.subr.mxu0 0.0
      %249 = vmatpush2.msra.mxu0 0.0
      %250 = vmatprep.subr.mxu0 0.0
      %251 = vmatpush2.msra.mxu0 0.0
      %252 = vmatprep.subr.mxu0 0.0
      %253 = vmatpush2.msra.mxu0 0.0
      %254 = vmatprep.subr.mxu0 0.0
      %255 = vmatpush2.msra.mxu0 0.0
      %256 = vmatprep.subr.mxu0 0.0
      %257 = vmatpush2.msra.mxu0 0.0
      %258 = vmatprep.subr.mxu0 0.0
      %259 = vmatpush2.msra.mxu0 0.0
      %260 = vmatprep.subr.mxu0 0.0
      %261 = vmatpush2.msra.mxu0 0.0
      %262 = vmatprep.subr.mxu0 0.0
      %263 = vmatpush2.msra.mxu0 0.0
      %264 = vmatprep.mubr.f32.mxu0 0.0
      %265 = vmatmul.mubr.f32.gmra.mxu0 %v189
      %v266 = vpop.f32.mrf.mxu0
      %v267 = vadd.f32 0.0, %v266
      %v268 = vpop.f32.mrf.mxu0
      %269 = vmatprep.mubr.f32.mxu0 0.0
      %270 = vmatmul.mubr.f32.gmra.mxu0 %v192
      %v271 = vpop.f32.mrf.mxu0
      %v272 = vadd.f32 0.0, %v271
      %v273 = vpop.f32.mrf.mxu0
      %274 = vmatprep.mubr.f32.mxu0 0.0
      %275 = vmatmul.mubr.f32.gmra.mxu0 %v195
      %v276 = vpop.f32.mrf.mxu0
      %v277 = vadd.f32 0.0, %v276
      %v278 = vpop.f32.mrf.mxu0
      %279 = vmatprep.mubr.f32.mxu0 0.0
      %280 = vmatmul.mubr.f32.gmra.mxu0 %v198
      %v281 = vpop.f32.mrf.mxu0
      %v282 = vadd.f32 0.0, %v281
      %v283 = vpop.f32.mrf.mxu0
      %284 = vdwg.mxu0
      %vm285 = vcmask 130048
      %286 = vst.msk [vmem:[%s174] sm:$0xff] %vm285, %v267
      %287 = vst.msk [vmem:[%s174 + $0x8] sm:$0xff] %vm285, %v272
      %288 = vst.msk [vmem:[%s174 + $0x10] sm:$0xff] %vm285, %v277
      %289 = vst.msk [vmem:[%s174 + $0x18] sm:$0xff] %vm285, %v282
      %p290 = scmp.lt.s32.totalorder %s17, 1
      %s291 = scalar_select %p290, %s17, 1
      %p292 = scmp.lt.s32.totalorder %s18, 0
      %s293 = scalar_select %p292, %s18, 0
      %s294 = smul.addr %s291, 4
      %s295 = sadd.s32 %s293, %s294
      %s296 = smul.addr %s295, 8
      %s297 = scalar_lea.vmem %s2, %s296
      // Predicated region
      $region29: #{patch_embed_forward.1} parent=27 // pred_check
        %p298 = pneg %p94
      $region30: #{patch_embed_forward.1} parent=27 // pred_check_branch
        %300 = sbr.rel (%p298) target = $region32
      $region31: #{patch_embed_forward.1} parent=27 // pred_region
        _
      $region32: #{patch_embed_forward.1} parent=27 // pred_fallthru
        _
    $region28: #{patch_embed_forward.1} parent=5 // pred_fallthru
      _
    %p301 = scmp.le.s32.totalorder 2, %s8
    // Predicated region
    $region33: #{patch_embed_forward.1} parent=5 // pred_check
      %p302 = pneg %p301
    $region34: #{patch_embed_forward.1} parent=5 // pred_check_branch
      %304 = sbr.rel (%p302) target = $region36
    $region35: #{patch_embed_forward.1} parent=5 // pred_region
      %s305 = ssub.s32 %s8, 2
      // Predicated region
      $region37: #{patch_embed_forward.1} parent=35 // pred_check
        %p306 = pneg %p100
      $region38: #{patch_embed_forward.1} parent=35 // pred_check_branch
        %308 = sbr.rel (%p306) target = $region40
      $region39: #{patch_embed_forward.1} parent=35 // pred_region
        %p309 = scmp.lt.s32.totalorder %s19, 1
        %s310 = scalar_select %p309, %s19, 1
        %p311 = scmp.lt.s32.totalorder %s20, 0
        %s312 = scalar_select %p311, %s20, 0
        %s313 = smul.addr %s310, 4
        %s314 = sadd.s32 %s312, %s313
        %s315 = smul.addr %s314, 8
        %s316 = scalar_lea.vmem %s2, %s315
      $region40: #{patch_embed_forward.1} parent=35 // pred_fallthru
        _
    $region36: #{patch_embed_forward.1} parent=5 // pred_fallthru
      _
  $region6: #{patch_embed_forward.1} parent=0 // loop_footer
    %s12 = sadd.s32 1, %s8
  $region7: #{patch_embed_forward.1} parent=0 // loop_footer_branch
    %7 = sbr.rel target = $region3
  $region8: #{patch_embed_forward.1} parent=0 // loop_exit
    _

</llo_original>
